<compile_context>
chip_gen: v7x
topology: tpu7x:2x2x1
jax: 0.10.0
libtpu: 0.0.40
codegen_flags: <defaults>
</compile_context>

<pallas_src>
import functools

import jax
import jax.numpy as jnp
import numpy as np
from jax.experimental import pallas as pl
from jax.experimental.pallas import tpu as pltpu


def acblock_kernel(x_ref, wcol_ref, bn_ref, w_ref, b_ref, o_ref, slab_ref,
                   *, H, W, d, cin, cout):
    HW = H * W
    x = x_ref[0]                        # (Cin, H*W)  f32, lane-dense
    wcol = wcol_ref[...]                # (1, H*W): column index  w = m mod W

    s2 = bn_ref[0]                      # folded BN scale / shift, (Cin, 1)
    t2 = bn_ref[1]
    s3 = bn_ref[2]
    t3 = bn_ref[3]

    # BatchNorm (eval mode) + ReLU, per branch (f32 on the VPU).
    a2 = jnp.maximum(x * s2 + t2, 0.0)
    a3 = jnp.maximum(x * s3 + t3, 0.0)

    # ---- branch 2: Conv2d k=(5,1), dilation (d,1), padding (2d,0) ----------
    # A row shift of r is a flat shift of r*W; the conv's zero padding is
    # recreated by 2d*W zeros on each side of the flattened activation.
    pad2 = jnp.zeros((cin, 2 * d * W), jnp.float32)
    a2f = jnp.concatenate([pad2, a2, pad2], axis=1)             # (Cin, HW+4dW)
    for k in range(5):
        tap = a2 if k == 2 else a2f[:, k * d * W:k * d * W + HW]
        slab_ref[k * cin:(k + 1) * cin, :] = tap

    # ---- branch 3: Conv2d k=(1,3), dilation (1,d), padding (0,d) -----------
    # A column shift of c is a flat shift of c; elements that would wrap
    # across a row boundary are exactly the conv pad columns -> zero them.
    pad3 = jnp.zeros((cin, d), jnp.float32)
    a3f = jnp.concatenate([pad3, a3, pad3], axis=1)             # (Cin, HW+2d)
    v0 = jnp.where(wcol >= d, a3f[:, 0:HW], 0.0)                # tap at w - d
    v1 = a3                                                     # tap at w
    v2 = jnp.where(wcol < W - d, a3f[:, 2 * d:2 * d + HW], 0.0)  # tap at w + d
    for k, tap in enumerate((v0, v1, v2)):
        slab_ref[(5 + k) * cin:(6 + k) * cin, :] = tap

    # ---- single fused contraction over all 8 taps x Cin on the MXU ---------
    out = jnp.dot(w_ref[...], slab_ref[...],
                  preferred_element_type=jnp.float32)           # (Cout, HW)
    o_ref[0] = out + b_ref[...]                                 # + (b2 + b3)


def acblock_forward(x_nchw, params, dilation):
    d = 2 ** dilation
    N, Cin, H, W = x_nchw.shape
    HW = H * W

    # Native NCHW layout, flattened spatially (free reshape — no transpose,
    # pad or mask passes over HBM).
    x = x_nchw.astype(jnp.float32).reshape(N, Cin, HW)

    eps = 1e-5

    def bn_fold(g, b, mean, var):
        scale = g / jnp.sqrt(var + eps)
        return scale, b - mean * scale

    s2, t2 = bn_fold(params['bn2_gamma'], params['bn2_beta'],
                     params['bn2_mean'], params['bn2_var'])
    s3, t3 = bn_fold(params['bn3_gamma'], params['bn3_beta'],
                     params['bn3_mean'], params['bn3_var'])
    bn = jnp.stack([s2, t2, s3, t3], axis=0).reshape(4, Cin, 1)   # (4, Cin, 1)

    # Conv weights -> one (Cout, 8*Cin) matrix; column order matches the
    # in-kernel slab: [branch2 taps k=0..4, branch3 taps k=0..2] x Cin.
    w2 = params['w2'][:, :, :, 0]                                 # (Cout, Cin, 5)
    w3 = params['w3'][:, :, 0, :]                                 # (Cout, Cin, 3)
    Cout = w2.shape[0]
    w_all = jnp.concatenate(
        [jnp.transpose(w2, (0, 2, 1)).reshape(Cout, 5 * Cin),
         jnp.transpose(w3, (0, 2, 1)).reshape(Cout, 3 * Cin)], axis=1)
    bias = (params['b2'] + params['b3']).reshape(Cout, 1)

    # Tiny per-column index vector (w = m mod W) for the branch-3 boundary mask.
    wcol = jnp.tile(jnp.arange(W, dtype=jnp.float32), H).reshape(1, HW)

    kernel = functools.partial(acblock_kernel, H=H, W=W, d=d, cin=Cin, cout=Cout)

    out = pl.pallas_call(
        kernel,
        out_shape=jax.ShapeDtypeStruct((N, Cout, HW), jnp.float32),
        grid=(N,),
        in_specs=[
            pl.BlockSpec((1, Cin, HW), lambda n: (n, 0, 0)),
            pl.BlockSpec((1, HW), lambda n: (0, 0)),
            pl.BlockSpec((4, Cin, 1), lambda n: (0, 0, 0)),
            pl.BlockSpec((Cout, 8 * Cin), lambda n: (0, 0)),
            pl.BlockSpec((Cout, 1), lambda n: (0, 0)),
        ],
        out_specs=pl.BlockSpec((1, Cout, HW), lambda n: (n, 0, 0)),
        scratch_shapes=[pltpu.VMEM((8 * Cin, HW), jnp.float32)],   # im2col slab
        compiler_params=pltpu.CompilerParams(dimension_semantics=("parallel",)),
    )(x, wcol, bn, w_all, bias)

    return out.reshape(N, Cout, H, W)                              # NCHW, free


def acblock_reference(x, p, dilation):
    """Pure-JAX reference (NCHW), mirrors the PyTorch forward in eval mode."""
    d = 2 ** dilation
    eps = 1e-5

    def bn(x, g, b, m, v):
        sc = (g / jnp.sqrt(v + eps))[None, :, None, None]
        return (x - m[None, :, None, None]) * sc + b[None, :, None, None]

    a2 = jax.nn.relu(bn(x, p['bn2_gamma'], p['bn2_beta'], p['bn2_mean'], p['bn2_var']))
    a3 = jax.nn.relu(bn(x, p['bn3_gamma'], p['bn3_beta'], p['bn3_mean'], p['bn3_var']))
    dn = ('NCHW', 'OIHW', 'NCHW')
    o2 = jax.lax.conv_general_dilated(
        a2, p['w2'], (1, 1), ((2 * d, 2 * d), (0, 0)), rhs_dilation=(d, 1),
        dimension_numbers=dn, precision=jax.lax.Precision.HIGHEST)
    o3 = jax.lax.conv_general_dilated(
        a3, p['w3'], (1, 1), ((0, 0), (d, d)), rhs_dilation=(1, d),
        dimension_numbers=dn, precision=jax.lax.Precision.HIGHEST)
    return (o2 + p['b2'][None, :, None, None]) + (o3 + p['b3'][None, :, None, None])


if __name__ == "__main__":
    key = jax.random.PRNGKey(0)
    keys = jax.random.split(key, 16)
    N, Cin, Cout, H, W, dilation = 2, 4, 8, 16, 16, 1

    params = {
        'bn2_gamma': 1.0 + 0.1 * jax.random.normal(keys[0], (Cin,), jnp.float32),
        'bn2_beta': 0.1 * jax.random.normal(keys[1], (Cin,), jnp.float32),
        'bn2_mean': 0.1 * jax.random.normal(keys[2], (Cin,), jnp.float32),
        'bn2_var': 0.5 + jnp.abs(jax.random.normal(keys[3], (Cin,), jnp.float32)),
        'bn3_gamma': 1.0 + 0.1 * jax.random.normal(keys[4], (Cin,), jnp.float32),
        'bn3_beta': 0.1 * jax.random.normal(keys[5], (Cin,), jnp.float32),
        'bn3_mean': 0.1 * jax.random.normal(keys[6], (Cin,), jnp.float32),
        'bn3_var': 0.5 + jnp.abs(jax.random.normal(keys[7], (Cin,), jnp.float32)),
        'w2': 0.1 * jax.random.normal(keys[8], (Cout, Cin, 5, 1), jnp.float32),
        'b2': 0.1 * jax.random.normal(keys[9], (Cout,), jnp.float32),
        'w3': 0.1 * jax.random.normal(keys[10], (Cout, Cin, 1, 3), jnp.float32),
        'b3': 0.1 * jax.random.normal(keys[11], (Cout,), jnp.float32),
    }
    x = jax.random.normal(keys[12], (N, Cin, H, W), jnp.float32)

    out = jax.block_until_ready(acblock_forward(x, params, dilation))
    assert out.shape == (N, Cout, H, W)

    ref = jax.block_until_ready(acblock_reference(x, params, dilation))
    np.testing.assert_allclose(np.asarray(out), np.asarray(ref), rtol=1e-3, atol=1e-3)

    print("KERNEL_OK")
</pallas_src>

<mosaic_0001>
module attributes {stable_mosaic.version = 11 : i64} {
  func.func @acblock_kernel(%arg0: i32, %arg1: memref<1x4x256xf32, #tpu.memory_space<vmem>>, %arg2: memref<1x256xf32, #tpu.memory_space<vmem>>, %arg3: memref<4x4x1xf32, #tpu.memory_space<vmem>>, %arg4: memref<8x32xf32, #tpu.memory_space<vmem>>, %arg5: memref<8x1xf32, #tpu.memory_space<vmem>>, %arg6: memref<1x8x256xf32, #tpu.memory_space<vmem>>, %arg7: memref<32x256xf32, #tpu.memory_space<vmem>>) attributes {dimension_semantics = [#tpu.dimension_semantics<parallel>], iteration_bounds = array<i64: 2>, scalar_prefetch = 0 : i64, scratch_operands = 1 : i64, tpu.core_type = #tpu.core_type<tc>, window_params = [{transform_indices = @transform_0, window_bounds = array<i64: 1, 4, 256>}, {pipeline_mode = #tpu.pipeline_mode<synchronous>, transform_indices = @transform_1, window_bounds = array<i64: 1, 256>}, {pipeline_mode = #tpu.pipeline_mode<synchronous>, transform_indices = @transform_2, window_bounds = array<i64: 4, 4, 1>}, {pipeline_mode = #tpu.pipeline_mode<synchronous>, transform_indices = @transform_3, window_bounds = array<i64: 8, 32>}, {pipeline_mode = #tpu.pipeline_mode<synchronous>, transform_indices = @transform_4, window_bounds = array<i64: 8, 1>}, {transform_indices = @transform_5, window_bounds = array<i64: 1, 8, 256>}]} {
    %c0 = arith.constant 0 : index
    %c0_0 = arith.constant 0 : index
    %c0_1 = arith.constant 0 : index
    %0 = vector.load %arg1[%c0, %c0_0, %c0_1] : memref<1x4x256xf32, #tpu.memory_space<vmem>>, vector<1x4x256xf32>
    %1 = vector.shape_cast %0 : vector<1x4x256xf32> to vector<4x256xf32>
    %c0_2 = arith.constant 0 : index
    %c0_3 = arith.constant 0 : index
    %2 = vector.load %arg2[%c0_2, %c0_3] : memref<1x256xf32, #tpu.memory_space<vmem>>, vector<1x256xf32>
    %c0_4 = arith.constant 0 : index
    %c0_5 = arith.constant 0 : index
    %c0_6 = arith.constant 0 : index
    %3 = vector.load %arg3[%c0_4, %c0_5, %c0_6] : memref<4x4x1xf32, #tpu.memory_space<vmem>>, vector<1x4x1xf32>
    %4 = vector.shape_cast %3 : vector<1x4x1xf32> to vector<4x1xf32>
    %c1 = arith.constant 1 : index
    %c0_7 = arith.constant 0 : index
    %c0_8 = arith.constant 0 : index
    %5 = vector.load %arg3[%c1, %c0_7, %c0_8] : memref<4x4x1xf32, #tpu.memory_space<vmem>>, vector<1x4x1xf32>
    %6 = vector.shape_cast %5 : vector<1x4x1xf32> to vector<4x1xf32>
    %c2 = arith.constant 2 : index
    %c0_9 = arith.constant 0 : index
    %c0_10 = arith.constant 0 : index
    %7 = vector.load %arg3[%c2, %c0_9, %c0_10] : memref<4x4x1xf32, #tpu.memory_space<vmem>>, vector<1x4x1xf32>
    %8 = vector.shape_cast %7 : vector<1x4x1xf32> to vector<4x1xf32>
    %c3 = arith.constant 3 : index
    %c0_11 = arith.constant 0 : index
    %c0_12 = arith.constant 0 : index
    %9 = vector.load %arg3[%c3, %c0_11, %c0_12] : memref<4x4x1xf32, #tpu.memory_space<vmem>>, vector<1x4x1xf32>
    %10 = vector.shape_cast %9 : vector<1x4x1xf32> to vector<4x1xf32>
    %11 = vector.broadcast %4 : vector<4x1xf32> to vector<4x256xf32>
    %12 = arith.mulf %1, %11 : vector<4x256xf32>
    %13 = vector.broadcast %6 : vector<4x1xf32> to vector<4x256xf32>
    %14 = arith.addf %12, %13 : vector<4x256xf32>
    %cst = arith.constant 0.000000e+00 : f32
    %15 = vector.broadcast %cst : f32 to vector<4x256xf32>
    %16 = arith.maximumf %14, %15 : vector<4x256xf32>
    %17 = vector.broadcast %8 : vector<4x1xf32> to vector<4x256xf32>
    %18 = arith.mulf %1, %17 : vector<4x256xf32>
    %19 = vector.broadcast %10 : vector<4x1xf32> to vector<4x256xf32>
    %20 = arith.addf %18, %19 : vector<4x256xf32>
    %cst_13 = arith.constant 0.000000e+00 : f32
    %21 = vector.broadcast %cst_13 : f32 to vector<4x256xf32>
    %22 = arith.maximumf %20, %21 : vector<4x256xf32>
    %cst_14 = arith.constant 0.000000e+00 : f32
    %23 = vector.broadcast %cst_14 : f32 to vector<4x64xf32>
    %24 = tpu.concatenate %23, %16, %23 in 1 : vector<4x64xf32>, vector<4x256xf32>, vector<4x64xf32> -> vector<4x384xf32>
    %25 = vector.extract_strided_slice %24 {offsets = [0, 0], sizes = [4, 256], strides = [1, 1]} : vector<4x384xf32> to vector<4x256xf32>
    %c0_15 = arith.constant 0 : index
    %c0_16 = arith.constant 0 : index
    %26 = vector.load %arg7[%c0_15, %c0_16] : memref<32x256xf32, #tpu.memory_space<vmem>>, vector<4x256xf32>
    tpu.vector_store %arg7[%c0_15, %c0_16], %25 {strides = array<i32>} : memref<32x256xf32, #tpu.memory_space<vmem>>, vector<4x256xf32>,
    %27 = vector.extract_strided_slice %24 {offsets = [0, 32], sizes = [4, 256], strides = [1, 1]} : vector<4x384xf32> to vector<4x256xf32>
    %c4 = arith.constant 4 : index
    %c0_17 = arith.constant 0 : index
    %28 = vector.load %arg7[%c4, %c0_17] : memref<32x256xf32, #tpu.memory_space<vmem>>, vector<4x256xf32>
    tpu.vector_store %arg7[%c4, %c0_17], %27 {strides = array<i32>} : memref<32x256xf32, #tpu.memory_space<vmem>>, vector<4x256xf32>,
    %c8 = arith.constant 8 : index
    %c0_18 = arith.constant 0 : index
    %29 = vector.load %arg7[%c8, %c0_18] : memref<32x256xf32, #tpu.memory_space<vmem>>, vector<4x256xf32>
    tpu.vector_store %arg7[%c8, %c0_18], %16 {strides = array<i32>} : memref<32x256xf32, #tpu.memory_space<vmem>>, vector<4x256xf32>,
    %30 = vector.extract_strided_slice %24 {offsets = [0, 96], sizes = [4, 256], strides = [1, 1]} : vector<4x384xf32> to vector<4x256xf32>
    %c12 = arith.constant 12 : index
    %c0_19 = arith.constant 0 : index
    %31 = vector.load %arg7[%c12, %c0_19] : memref<32x256xf32, #tpu.memory_space<vmem>>, vector<4x256xf32>
    tpu.vector_store %arg7[%c12, %c0_19], %30 {strides = array<i32>} : memref<32x256xf32, #tpu.memory_space<vmem>>, vector<4x256xf32>,
    %32 = vector.extract_strided_slice %24 {offsets = [0, 128], sizes = [4, 256], strides = [1, 1]} : vector<4x384xf32> to vector<4x256xf32>
    %c16 = arith.constant 16 : index
    %c0_20 = arith.constant 0 : index
    %33 = vector.load %arg7[%c16, %c0_20] : memref<32x256xf32, #tpu.memory_space<vmem>>, vector<4x256xf32>
    tpu.vector_store %arg7[%c16, %c0_20], %32 {strides = array<i32>} : memref<32x256xf32, #tpu.memory_space<vmem>>, vector<4x256xf32>,
    %cst_21 = arith.constant 0.000000e+00 : f32
    %34 = vector.broadcast %cst_21 : f32 to vector<4x2xf32>
    %35 = tpu.concatenate %34, %22, %34 in 1 : vector<4x2xf32>, vector<4x256xf32>, vector<4x2xf32> -> vector<4x260xf32>
    %cst_22 = arith.constant 2.000000e+00 : f32
    %36 = vector.broadcast %cst_22 : f32 to vector<1x256xf32>
    %37 = arith.cmpf oge, %2, %36 : vector<1x256xf32>
    %38 = vector.extract_strided_slice %35 {offsets = [0, 0], sizes = [4, 256], strides = [1, 1]} : vector<4x260xf32> to vector<4x256xf32>
    %cst_23 = arith.constant 0.000000e+00 : f32
    %39 = vector.shape_cast %37 : vector<1x256xi1> to vector<1x256xi1>
    %40 = vector.broadcast %39 : vector<1x256xi1> to vector<4x256xi1>
    %41 = vector.broadcast %cst_23 : f32 to vector<4x256xf32>
    %42 = arith.select %40, %38, %41 : vector<4x256xi1>, vector<4x256xf32>
    %cst_24 = arith.constant 1.400000e+01 : f32
    %43 = vector.broadcast %cst_24 : f32 to vector<1x256xf32>
    %44 = arith.cmpf olt, %2, %43 : vector<1x256xf32>
    %45 = vector.extract_strided_slice %35 {offsets = [0, 4], sizes = [4, 256], strides = [1, 1]} : vector<4x260xf32> to vector<4x256xf32>
    %cst_25 = arith.constant 0.000000e+00 : f32
    %46 = vector.shape_cast %44 : vector<1x256xi1> to vector<1x256xi1>
    %47 = vector.broadcast %46 : vector<1x256xi1> to vector<4x256xi1>
    %48 = vector.broadcast %cst_25 : f32 to vector<4x256xf32>
    %49 = arith.select %47, %45, %48 : vector<4x256xi1>, vector<4x256xf32>
    %c20 = arith.constant 20 : index
    %c0_26 = arith.constant 0 : index
    %50 = vector.load %arg7[%c20, %c0_26] : memref<32x256xf32, #tpu.memory_space<vmem>>, vector<4x256xf32>
    tpu.vector_store %arg7[%c20, %c0_26], %42 {strides = array<i32>} : memref<32x256xf32, #tpu.memory_space<vmem>>, vector<4x256xf32>,
    %c24 = arith.constant 24 : index
    %c0_27 = arith.constant 0 : index
    %51 = vector.load %arg7[%c24, %c0_27] : memref<32x256xf32, #tpu.memory_space<vmem>>, vector<4x256xf32>
    tpu.vector_store %arg7[%c24, %c0_27], %22 {strides = array<i32>} : memref<32x256xf32, #tpu.memory_space<vmem>>, vector<4x256xf32>,
    %c28 = arith.constant 28 : index
    %c0_28 = arith.constant 0 : index
    %52 = vector.load %arg7[%c28, %c0_28] : memref<32x256xf32, #tpu.memory_space<vmem>>, vector<4x256xf32>
    tpu.vector_store %arg7[%c28, %c0_28], %49 {strides = array<i32>} : memref<32x256xf32, #tpu.memory_space<vmem>>, vector<4x256xf32>,
    %c0_29 = arith.constant 0 : index
    %c0_30 = arith.constant 0 : index
    %53 = vector.load %arg4[%c0_29, %c0_30] : memref<8x32xf32, #tpu.memory_space<vmem>>, vector<8x32xf32>
    %c0_31 = arith.constant 0 : index
    %c0_32 = arith.constant 0 : index
    %54 = vector.load %arg7[%c0_31, %c0_32] : memref<32x256xf32, #tpu.memory_space<vmem>>, vector<32x256xf32>
    %cst_33 = arith.constant dense<0.000000e+00> : vector<8x256xf32>
    %55 = tpu.matmul %53, %54, %cst_33 {dimension_numbers = #tpu.dot_dimension_numbers<[1], [0], [0], [1], [0, 0, 1, 1], [], []>} : vector<8x32xf32>, vector<32x256xf32>, vector<8x256xf32> -> vector<8x256xf32>
    %c0_34 = arith.constant 0 : index
    %c0_35 = arith.constant 0 : index
    %56 = vector.load %arg5[%c0_34, %c0_35] : memref<8x1xf32, #tpu.memory_space<vmem>>, vector<8x1xf32>
    %57 = vector.broadcast %56 : vector<8x1xf32> to vector<8x256xf32>
    %58 = arith.addf %55, %57 : vector<8x256xf32>
    %c0_36 = arith.constant 0 : index
    %c0_37 = arith.constant 0 : index
    %c0_38 = arith.constant 0 : index
    %59 = vector.load %arg6[%c0_36, %c0_37, %c0_38] : memref<1x8x256xf32, #tpu.memory_space<vmem>>, vector<1x8x256xf32>
    %60 = vector.shape_cast %59 : vector<1x8x256xf32> to vector<8x256xf32>
    %61 = vector.shape_cast %58 : vector<8x256xf32> to vector<1x8x256xf32>
    tpu.vector_store %arg6[%c0_36, %c0_37, %c0_38], %61 {strides = array<i32>} : memref<1x8x256xf32, #tpu.memory_space<vmem>>, vector<1x8x256xf32>,
    return
  }
  func.func @transform_0(%arg0: i32) -> (i32, i32, i32) {
    %c0_i32 = arith.constant 0 : i32
    %c0_i32_0 = arith.constant 0 : i32
    %c0_i32_1 = arith.constant 0 : i32
    return %arg0, %c0_i32, %c0_i32_0 : i32, i32, i32
  }
  func.func @transform_1(%arg0: i32) -> (i32, i32) {
    %c0_i32 = arith.constant 0 : i32
    %c0_i32_0 = arith.constant 0 : i32
    %c0_i32_1 = arith.constant 0 : i32
    return %c0_i32, %c0_i32_0 : i32, i32
  }
  func.func @transform_2(%arg0: i32) -> (i32, i32, i32) {
    %c0_i32 = arith.constant 0 : i32
    %c0_i32_0 = arith.constant 0 : i32
    %c0_i32_1 = arith.constant 0 : i32
    %c0_i32_2 = arith.constant 0 : i32
    return %c0_i32, %c0_i32_0, %c0_i32_1 : i32, i32, i32
  }
  func.func @transform_3(%arg0: i32) -> (i32, i32) {
    %c0_i32 = arith.constant 0 : i32
    %c0_i32_0 = arith.constant 0 : i32
    %c0_i32_1 = arith.constant 0 : i32
    return %c0_i32, %c0_i32_0 : i32, i32
  }
  func.func @transform_4(%arg0: i32) -> (i32, i32) {
    %c0_i32 = arith.constant 0 : i32
    %c0_i32_0 = arith.constant 0 : i32
    %c0_i32_1 = arith.constant 0 : i32
    return %c0_i32, %c0_i32_0 : i32, i32
  }
  func.func @transform_5(%arg0: i32) -> (i32, i32, i32) {
    %c0_i32 = arith.constant 0 : i32
    %c0_i32_0 = arith.constant 0 : i32
    %c0_i32_1 = arith.constant 0 : i32
    return %arg0, %c0_i32, %c0_i32_0 : i32, i32, i32
  }
}

</mosaic_0001>

<llo_original>
// kernel: tpu_custom_call.1
$region0: #{tpu_custom_call.1}
  #allocation0 [shape = 'u32[]', space=smem, size = 0x4, offset = 0x4, fixed_abs, tag = 'smem constant byte address 0x4 - core index']
  #allocation1 [shape = 'u32[144,128]{1,0:T(1,128)}', space=vmem, size = 0x12000, scoped, tag = 'internal scratch']
  #allocation2 [shape = 'f32[32,256]{1,0:T(8,128)}', space=vmem, size = 0x8000, scoped, tag = 'scratch operand']
  %s0 = inlined_call_operand.vmem [shape: f32[2,4,256], index: 0, kind: input, shape index: {}]
  %s1 = inlined_call_operand.vmem [shape: f32[1,256], index: 1, kind: input, shape index: {}]
  %s2 = inlined_call_operand.vmem [shape: f32[4,4,1], index: 2, kind: input, shape index: {}]
  %s3 = inlined_call_operand.vmem [shape: f32[8,32], index: 3, kind: input, shape index: {}]
  %s4 = inlined_call_operand.vmem [shape: f32[8,1], index: 4, kind: input, shape index: {}]
  %s5 = inlined_call_operand.hbm [shape: f32[2,8,256], index: 5, kind: output, shape index: {}]
  %s6 = sld [smem:[#allocation0]]
  $region53: #{tpu_custom_call.1} parent=0
    _
  %s8 = ssub.s32 1, %s6
  %s9 = scalar_select 0, %s8, %s6
  $region1: #{tpu_custom_call.1} parent=0
    #allocation3 [shape = 'u8[16384]{0}', space=vmem, size = 0x4000, scoped, tag = 'output window, operand 0']
    #allocation4 [shape = 's32[2]{0}', space=sflag, size = 0x8, scoped, tag = 'scoped memory for tpu_custom_call.1']
    %10 = vsyncpa [#allocation4], 0
    %s11 = scalar_lea.sflag [#allocation4], 1
    %12 = vsyncpa %s11, 0
    loop: start=0, step=1, limit=4
    $region2: #{tpu_custom_call.1} parent=1 // loop_pre_header
      _
    $region3: #{tpu_custom_call.1} parent=1 // loop_header
      %s14 = sphi 0, %s18
      %p15 = scmp.ge.s32.totalorder %s14, 4
      %s24 = sphi 0, %s26
      %s27 = sphi 0, %s24
      %s28 = sphi 0, %s27
      %s44 = sphi 0, %s28
      %s48 = sphi 0, %s48
      %s50 = sphi 0, %s48
      %s51 = sphi 0, %s50
      %s65 = sphi 0, %s51
      %s69 = sphi 0, %s69
      %s71 = sphi 0, %s69
      %s72 = sphi 0, %s71
      %s86 = sphi 0, %s72
      %s90 = sphi 0, %s90
      %s92 = sphi 0, %s90
      %s93 = sphi 0, %s92
      %s107 = sphi 0, %s93
      %s111 = sphi 0, %s111
      %s113 = sphi 0, %s111
      %s114 = sphi 0, %s113
      %s128 = sphi 0, %s114
      %s134 = sphi 0, %s136
      %s137 = sphi 0, %s134
      %s138 = sphi 0, %s137
      %s154 = sphi 0, %s138
    $region4: #{tpu_custom_call.1} parent=1 // loop_header_branch
      %17 = sbr.rel (%p15) target = $region8
    $region5: #{tpu_custom_call.1} parent=1 // loop_body
      %s19 = ssub.s32 %s14, 1
      %s20 = ssub.s32 %s14, 2
      %s21 = sadd.s32 %s14, 1
      %s22 = ssub.s32 %s14, %s21
      %p23 = scmp.eq.s32.totalorder %s22, 0
      %s25 = sadd.s32 %s24, 1
      %s26 = scalar_select %p23, %s24, %s25
      %p29 = pneg %p23
      %p30 = scmp.eq.s32.totalorder %s14, 1
      %p31 = por %p29, %p30
      %p32 = scmp.ne.s32.totalorder %s24, %s27
      %p33 = scmp.eq.s32.totalorder %s14, 0
      %p34 = por %p32, %p33
      %p35 = scmp.ne.s32.totalorder %s24, %s27
      %p36 = scmp.eq.s32.totalorder %s19, 1
      %p37 = por %p35, %p36
      %p38 = scmp.ne.s32.totalorder %s27, %s28
      %p39 = scmp.eq.s32.totalorder %s19, 0
      %p40 = por %p38, %p39
      %p41 = scmp.ne.s32.totalorder %s27, %s28
      %p42 = scmp.eq.s32.totalorder %s20, 1
      %p43 = por %p41, %p42
      %p45 = scmp.ne.s32.totalorder %s28, %s44
      %p46 = scmp.eq.s32.totalorder %s20, 0
      %p47 = por %p45, %p46
      %s49 = sadd.s32 %s48, 1
      %p52 = scmp.eq.s32.totalorder %s14, 1
      %p53 = scmp.ne.s32.totalorder %s48, %s50
      %p54 = scmp.eq.s32.totalorder %s14, 0
      %p55 = por %p53, %p54
      %p56 = scmp.ne.s32.totalorder %s48, %s50
      %p57 = scmp.eq.s32.totalorder %s19, 1
      %p58 = por %p56, %p57
      %p59 = scmp.ne.s32.totalorder %s50, %s51
      %p60 = scmp.eq.s32.totalorder %s19, 0
      %p61 = por %p59, %p60
      %p62 = scmp.ne.s32.totalorder %s50, %s51
      %p63 = scmp.eq.s32.totalorder %s20, 1
      %p64 = por %p62, %p63
      %p66 = scmp.ne.s32.totalorder %s51, %s65
      %p67 = scmp.eq.s32.totalorder %s20, 0
      %p68 = por %p66, %p67
      %s70 = sadd.s32 %s69, 1
      %p73 = scmp.eq.s32.totalorder %s14, 1
      %p74 = scmp.ne.s32.totalorder %s69, %s71
      %p75 = scmp.eq.s32.totalorder %s14, 0
      %p76 = por %p74, %p75
      %p77 = scmp.ne.s32.totalorder %s69, %s71
      %p78 = scmp.eq.s32.totalorder %s19, 1
      %p79 = por %p77, %p78
      %p80 = scmp.ne.s32.totalorder %s71, %s72
      %p81 = scmp.eq.s32.totalorder %s19, 0
      %p82 = por %p80, %p81
      %p83 = scmp.ne.s32.totalorder %s71, %s72
      %p84 = scmp.eq.s32.totalorder %s20, 1
      %p85 = por %p83, %p84
      %p87 = scmp.ne.s32.totalorder %s72, %s86
      %p88 = scmp.eq.s32.totalorder %s20, 0
      %p89 = por %p87, %p88
      %s91 = sadd.s32 %s90, 1
      %p94 = scmp.eq.s32.totalorder %s14, 1
      %p95 = scmp.ne.s32.totalorder %s90, %s92
      %p96 = scmp.eq.s32.totalorder %s14, 0
      %p97 = por %p95, %p96
      %p98 = scmp.ne.s32.totalorder %s90, %s92
      %p99 = scmp.eq.s32.totalorder %s19, 1
      %p100 = por %p98, %p99
      %p101 = scmp.ne.s32.totalorder %s92, %s93
      %p102 = scmp.eq.s32.totalorder %s19, 0
      %p103 = por %p101, %p102
      %p104 = scmp.ne.s32.totalorder %s92, %s93
      %p105 = scmp.eq.s32.totalorder %s20, 1
      %p106 = por %p104, %p105
      %p108 = scmp.ne.s32.totalorder %s93, %s107
      %p109 = scmp.eq.s32.totalorder %s20, 0
      %p110 = por %p108, %p109
      %s112 = sadd.s32 %s111, 1
      %p115 = scmp.eq.s32.totalorder %s14, 1
      %p116 = scmp.ne.s32.totalorder %s111, %s113
      %p117 = scmp.eq.s32.totalorder %s14, 0
      %p118 = por %p116, %p117
      %p119 = scmp.ne.s32.totalorder %s111, %s113
      %p120 = scmp.eq.s32.totalorder %s19, 1
      %p121 = por %p119, %p120
      %p122 = scmp.ne.s32.totalorder %s113, %s114
      %p123 = scmp.eq.s32.totalorder %s19, 0
      %p124 = por %p122, %p123
      %p125 = scmp.ne.s32.totalorder %s113, %s114
      %p126 = scmp.eq.s32.totalorder %s20, 1
      %p127 = por %p125, %p126
      %p129 = scmp.ne.s32.totalorder %s114, %s128
      %p130 = scmp.eq.s32.totalorder %s20, 0
      %p131 = por %p129, %p130
      %s132 = ssub.s32 %s14, %s21
      %p133 = scmp.eq.s32.totalorder %s132, 0
      %s135 = sadd.s32 %s134, 1
      %s136 = scalar_select %p133, %s134, %s135
      %p139 = pneg %p133
      %p140 = scmp.eq.s32.totalorder %s14, 1
      %p141 = por %p139, %p140
      %p142 = scmp.ne.s32.totalorder %s134, %s137
      %p143 = scmp.eq.s32.totalorder %s14, 0
      %p144 = por %p142, %p143
      %p145 = scmp.ne.s32.totalorder %s134, %s137
      %p146 = scmp.eq.s32.totalorder %s19, 1
      %p147 = por %p145, %p146
      %p148 = scmp.ne.s32.totalorder %s137, %s138
      %p149 = scmp.eq.s32.totalorder %s19, 0
      %p150 = por %p148, %p149
      %p151 = scmp.ne.s32.totalorder %s137, %s138
      %p152 = scmp.eq.s32.totalorder %s20, 1
      %p153 = por %p151, %p152
      %p155 = scmp.ne.s32.totalorder %s138, %s154
      %p156 = scmp.eq.s32.totalorder %s20, 0
      %p157 = por %p155, %p156
      %p158 = scmp.le.s32.totalorder 1, %s14
      %p159 = scmp.lt.s32.totalorder %s14, 3
      %p160 = pnand %p158, %p159
      %p161 = pneg %p160
      // Predicated region
      $region9: #{tpu_custom_call.1} parent=5 // pred_check
        _
      $region10: #{tpu_custom_call.1} parent=5 // pred_check_branch
        %163 = sbr.rel (%p160) target = $region12
      $region11: #{tpu_custom_call.1} parent=5 // pred_region
        %s164 = ssub.s32 %s14, 1
        // Predicated region
        $region13: #{tpu_custom_call.1} parent=11 // pred_check
          %p165 = pneg %p61
        $region14: #{tpu_custom_call.1} parent=11 // pred_check_branch
          %167 = sbr.rel (%p165) target = $region16
        $region15: #{tpu_custom_call.1} parent=11 // pred_region
          _
        $region16: #{tpu_custom_call.1} parent=11 // pred_fallthru
          _
        // Predicated region
        $region17: #{tpu_custom_call.1} parent=11 // pred_check
          %p168 = pneg %p82
        $region18: #{tpu_custom_call.1} parent=11 // pred_check_branch
          %170 = sbr.rel (%p168) target = $region20
        $region19: #{tpu_custom_call.1} parent=11 // pred_region
          _
        $region20: #{tpu_custom_call.1} parent=11 // pred_fallthru
          _
        // Predicated region
        $region21: #{tpu_custom_call.1} parent=11 // pred_check
          %p171 = pneg %p103
        $region22: #{tpu_custom_call.1} parent=11 // pred_check_branch
          %173 = sbr.rel (%p171) target = $region24
        $region23: #{tpu_custom_call.1} parent=11 // pred_region
          _
        $region24: #{tpu_custom_call.1} parent=11 // pred_fallthru
          _
        // Predicated region
        $region25: #{tpu_custom_call.1} parent=11 // pred_check
          %p174 = pneg %p124
        $region26: #{tpu_custom_call.1} parent=11 // pred_check_branch
          %176 = sbr.rel (%p174) target = $region28
        $region27: #{tpu_custom_call.1} parent=11 // pred_region
          _
        $region28: #{tpu_custom_call.1} parent=11 // pred_fallthru
          _
      $region12: #{tpu_custom_call.1} parent=5 // pred_fallthru
        _
      %p177 = scmp.lt.s32.totalorder %s14, 2
      // Predicated region
      $region29: #{tpu_custom_call.1} parent=5 // pred_check
        %p178 = pneg %p177
      $region30: #{tpu_custom_call.1} parent=5 // pred_check_branch
        %180 = sbr.rel (%p178) target = $region32
      $region31: #{tpu_custom_call.1} parent=5 // pred_region
        // Predicated region
        $region33: #{tpu_custom_call.1} parent=31 // pred_check
          %p181 = pneg %p34
        $region34: #{tpu_custom_call.1} parent=31 // pred_check_branch
          %183 = sbr.rel (%p181) target = $region36
        $region35: #{tpu_custom_call.1} parent=31 // pred_region
          %p184 = scmp.lt.s32.totalorder %s14, 1
          %s185 = scalar_select %p184, %s14, 1
          %s186 = smul.addr %s185, 2
          %s187 = smul.addr %s186, 4
          %s188 = scalar_lea.vmem %s0, %s187
        $region36: #{tpu_custom_call.1} parent=31 // pred_fallthru
          _
      $region32: #{tpu_custom_call.1} parent=5 // pred_fallthru
        _
      %p189 = scmp.le.s32.totalorder 1, %s14
      %p190 = scmp.lt.s32.totalorder %s14, 3
      %p191 = pnand %p189, %p190
      %p192 = pneg %p191
      // Predicated region
      $region37: #{tpu_custom_call.1} parent=5 // pred_check
        _
      $region38: #{tpu_custom_call.1} parent=5 // pred_check_branch
        %194 = sbr.rel (%p191) target = $region40
      $region39: #{tpu_custom_call.1} parent=5 // pred_region
        %s195 = ssub.s32 %s14, 1
        %p196 = scmp.lt.s32.totalorder %s19, 1
        %s197 = scalar_select %p196, %s19, 1
        %s198 = smul.addr %s197, 2
        %s199 = smul.addr %s198, 4
        %s200 = scalar_lea.vmem %s0, %s199
        %p201 = pneg %p40
        %p202 = pneg %p37
        %p203 = pneg %p61
        %p204 = pneg %p58
        %p205 = pneg %p82
        %p206 = pneg %p79
        %p207 = pneg %p103
        %p208 = pneg %p100
        %p209 = pneg %p124
        %p210 = pneg %p121
        %p211 = pneg %p150
        %p212 = pneg %p147
        %s213 = sand.u32 %s137, 1
        %s214 = scalar_lea.sflag [#allocation4], %s213
        %s215 = sand.u32 %s137, 1
        %s216 = smul.addr %s215, 16
        %s217 = scalar_lea.vmem [#allocation3], %s216
        %p218 = scmp.lt.s32.totalorder %s19, 1
        %s219 = scalar_select %p218, %s19, 1
        %s220 = smul.addr %s219, 2
        %s221 = smul.addr %s220, 4
        %s222 = scalar_lea.vmem %s0, %s221
        %v223 = vld [vmem:[%s222] sm:$0xff]
        %v224 = vld [vmem:[%s1] sm:$0x3]
        %v225 = vld [vmem:[%s2] sm:$0xf]
        %s226 = scalar_lea.vmem %s2, 4
        %v227 = vld [vmem:[%s226] sm:$0xf]
        %s228 = scalar_lea.vmem %s2, 8
        %v229 = vld [vmem:[%s228] sm:$0xf]
        %s230 = scalar_lea.vmem %s2, 12
        %v231 = vld [vmem:[%s230] sm:$0xf]
        %233 = vset.pattern.permute.xlu0 0
        %234 = vperm.xlu0 %233, %v225
        %v235 = vpop.permute.xlu0 %234
        %v237 = vunpack.c.l.s4 839922192
        %v238 = vunpack.c.0.s8 %v237
        %v239 = vlaneseq
        %v240 = vshrl.u32 %v239, 7
        %v241 = vsub.s32 %v238, %v240
        %v242 = vrot.slane %v235, %v241
        %v244 = vmul.f32 %v223, %v242
        %246 = vset.pattern.permute.xlu0 0
        %247 = vperm.xlu0 %246, %v227
        %v248 = vpop.permute.xlu0 %247
        %v250 = vunpack.c.l.s4 839922192
        %v251 = vunpack.c.0.s8 %v250
        %v252 = vlaneseq
        %v253 = vshrl.u32 %v252, 7
        %v254 = vsub.s32 %v251, %v253
        %v255 = vrot.slane %v248, %v254
        %v257 = vadd.f32 %v244, %v255
        %v258 = vmax.f32 %v257, 0.0
        %260 = vset.pattern.permute.xlu0 0
        %261 = vperm.xlu0 %260, %v229
        %v262 = vpop.permute.xlu0 %261
        %v264 = vunpack.c.l.s4 839922192
        %v265 = vunpack.c.0.s8 %v264
        %v266 = vlaneseq
        %v267 = vshrl.u32 %v266, 7
        %v268 = vsub.s32 %v265, %v267
        %v269 = vrot.slane %v262, %v268
        %v271 = vmul.f32 %v223, %v269
        %273 = vset.pattern.permute.xlu0 0
        %274 = vperm.xlu0 %273, %v231
        %v275 = vpop.permute.xlu0 %274
        %v277 = vunpack.c.l.s4 839922192
        %v278 = vunpack.c.0.s8 %v277
        %v279 = vlaneseq
        %v280 = vshrl.u32 %v279, 7
        %v281 = vsub.s32 %v278, %v280
        %v282 = vrot.slane %v275, %v281
        %v284 = vadd.f32 %v271, %v282
        %v285 = vmax.f32 %v284, 0.0
        %v287 = vcombine.high %v258, %v258
        %288 = vrot.lane.b32.xlu0 %v258, 64
        %v289 = vpop.permute.xlu0 %288
        %290 = vrot.lane.b32.xlu0 %v287, 64
        %v291 = vpop.permute.xlu0 %290
        %vm292 = vcmask 523264
        %v293 = vsel %vm292, %v289, %v291
        %v297 = vsel %vm292, 0.0, %v289
        %v298 = vsel %vm292, %v291, 0.0
        %299 = vst [vmem:[#allocation2] sm:$0xf] %v297
        %300 = vst [vmem:[#allocation2 + $0x8] sm:$0xf] %v293
        %v303 = vrot.slane %v297, 4
        %v304 = vrot.slane %v293, 4
        %v305 = vrot.slane %v298, 4
        %306 = vrot.lane.b32.xlu0 %v303, 96
        %v307 = vpop.permute.xlu0 %306
        %308 = vrot.lane.b32.xlu0 %v304, 96
        %v309 = vpop.permute.xlu0 %308
        %310 = vrot.lane.b32.xlu0 %v305, 96
        %v311 = vpop.permute.xlu0 %310
        %vm312 = vcmask 785408
        %v313 = vsel %vm312, %v307, %v309
        %v314 = vsel %vm312, %v309, %v311
        %317 = vst [vmem:[#allocation2] sm:$0xf0] %v313
        %318 = vst [vmem:[#allocation2 + $0x8] sm:$0xf0] %v314
        %320 = vst [vmem:[#allocation2 + $0x10] sm:$0xf] %v258
        %321 = vst [vmem:[#allocation2 + $0x18] sm:$0xf] %v287
        %322 = vrot.lane.b32.xlu0 %v303, 32
        %v323 = vpop.permute.xlu0 %322
        %324 = vrot.lane.b32.xlu0 %v304, 32
        %v325 = vpop.permute.xlu0 %324
        %326 = vrot.lane.b32.xlu0 %v305, 32
        %v327 = vpop.permute.xlu0 %326
        %vm328 = vcmask 261120
        %v329 = vsel %vm328, %v323, %v325
        %v330 = vsel %vm328, %v325, %v327
        %333 = vst [vmem:[#allocation2 + $0x10] sm:$0xf0] %v329
        %334 = vst [vmem:[#allocation2 + $0x18] sm:$0xf0] %v330
        %335 = vst [vmem:[#allocation2 + $0x20] sm:$0xf] %v293
        %336 = vst [vmem:[#allocation2 + $0x28] sm:$0xf] %v298
        %v338 = vcombine.high %v285, %v285
        %339 = vrot.lane.b32.xlu0 %v285, 2
        %v340 = vpop.permute.xlu0 %339
        %341 = vrot.lane.b32.xlu0 %v338, 2
        %v342 = vpop.permute.xlu0 %341
        %vm343 = vcmask 15360
        %v344 = vsel %vm343, %v340, %v342
        %v348 = vsel %vm343, 0.0, %v340
        %v349 = vsel %vm343, %v342, 0.0
        %vm350 = vcmp.ge.f32.partialorder %v224, 2.0
        %v351 = vsel %vm350, 1, 0
        %v352 = vlaneseq
        %v353 = vshrl.u32 %v352, 7
        %v354 = vsub.s32 0, %v353
        %v355 = vrot.slane %v351, %v354
        %v356 = vlaneseq
        %v357 = vshrl.u32 %v356, 7
        %v358 = vsub.s32 1, %v357
        %v359 = vrot.slane %v351, %v358
        %vm360 = vcmp.eq.s32.totalorder %v355, 1
        %vm361 = vcmp.eq.s32.totalorder %v359, 1
        %v362 = vsel %vm360, %v348, 0.0
        %v363 = vsel %vm361, %v344, 0.0
        %vm364 = vcmp.lt.f32.partialorder %v224, 14.0
        %v365 = vsel %vm364, 1, 0
        %v366 = vlaneseq
        %v367 = vshrl.u32 %v366, 7
        %v368 = vsub.s32 0, %v367
        %v369 = vrot.slane %v365, %v368
        %v370 = vlaneseq
        %v371 = vshrl.u32 %v370, 7
        %v372 = vsub.s32 1, %v371
        %v373 = vrot.slane %v365, %v372
        %vm374 = vcmp.eq.s32.totalorder %v369, 1
        %vm375 = vcmp.eq.s32.totalorder %v373, 1
        %378 = vrot.lane.b32.xlu0 %v348, 124
        %v379 = vpop.permute.xlu0 %378
        %380 = vrot.lane.b32.xlu0 %v344, 124
        %v381 = vpop.permute.xlu0 %380
        %382 = vrot.lane.b32.xlu0 %v349, 124
        %v383 = vpop.permute.xlu0 %382
        %vm384 = vcmask 1014784
        %v385 = vsel %vm384, %v379, %v381
        %v386 = vsel %vm384, %v381, %v383
        %v389 = vsel %vm374, %v385, 0.0
        %v390 = vsel %vm375, %v386, 0.0
        %v393 = vrot.slane %v362, 4
        %v394 = vrot.slane %v363, 4
        %397 = vst [vmem:[#allocation2 + $0x20] sm:$0xf0] %v393
        %398 = vst [vmem:[#allocation2 + $0x28] sm:$0xf0] %v394
        %400 = vst [vmem:[#allocation2 + $0x30] sm:$0xf] %v285
        %401 = vst [vmem:[#allocation2 + $0x38] sm:$0xf] %v338
        %v404 = vrot.slane %v389, 4
        %v405 = vrot.slane %v390, 4
        %408 = vst [vmem:[#allocation2 + $0x30] sm:$0xf0] %v404
        %409 = vst [vmem:[#allocation2 + $0x38] sm:$0xf0] %v405
        %v410 = vld [vmem:[%s3] sm:$0xff]
        %v411 = vld [vmem:[#allocation2] sm:$0xff]
        %v412 = vld [vmem:[#allocation2 + $0x8] sm:$0xff]
        %v413 = vld [vmem:[#allocation2 + $0x10] sm:$0xff]
        %v414 = vld [vmem:[#allocation2 + $0x18] sm:$0xff]
        %v415 = vld [vmem:[#allocation2 + $0x20] sm:$0xff]
        %v416 = vld [vmem:[#allocation2 + $0x28] sm:$0xff]
        %v417 = vld [vmem:[#allocation2 + $0x30] sm:$0xff]
        %v418 = vld [vmem:[#allocation2 + $0x38] sm:$0xff]
        %v419 = vld [vmem:[%s4] sm:$0xff]
        %421 = vset.pattern.permute.xlu0 0
        %422 = vperm.xlu0 %421, %v419
        %v423 = vpop.permute.xlu0 %422
        %v426 = vsel %vm328, %v410, 0
        %428 = vmatprep.subr.mxu0 %v412
        %429 = vmatpush1.msra.mxu0 %v411
        %430 = vmatprep.subr.mxu0 %v414
        %431 = vmatpush1.msra.mxu0 %v413
        %432 = vmatprep.subr.mxu0 %v416
        %433 = vmatpush1.msra.mxu0 %v415
        %434 = vmatprep.subr.mxu0 %v418
        %435 = vmatpush1.msra.mxu0 %v417
        %436 = vmatprep.subr.mxu0 0.0
        %437 = vmatpush1.msra.mxu0 0.0
        %438 = vmatprep.subr.mxu0 0.0
        %439 = vmatpush1.msra.mxu0 0.0
        %440 = vmatprep.subr.mxu0 0.0
        %441 = vmatpush1.msra.mxu0 0.0
        %442 = vmatprep.subr.mxu0 0.0
        %443 = vmatpush1.msra.mxu0 0.0
        %444 = vmatprep.subr.mxu0 0.0
        %445 = vmatpush1.msra.mxu0 0.0
        %446 = vmatprep.subr.mxu0 0.0
        %447 = vmatpush1.msra.mxu0 0.0
        %448 = vmatprep.subr.mxu0 0.0
        %449 = vmatpush1.msra.mxu0 0.0
        %450 = vmatprep.subr.mxu0 0.0
        %451 = vmatpush1.msra.mxu0 0.0
        %452 = vmatprep.subr.mxu0 0.0
        %453 = vmatpush1.msra.mxu0 0.0
        %454 = vmatprep.subr.mxu0 0.0
        %455 = vmatpush1.msra.mxu0 0.0
        %456 = vmatprep.subr.mxu0 0.0
        %457 = vmatpush1.msra.mxu0 0.0
        %458 = vmatprep.subr.mxu0 0.0
        %459 = vmatpush1.msra.mxu0 0.0
        %460 = vmatprep.subr.mxu0 0.0
        %461 = vmatpush1.msra.mxu0 0.0
        %462 = vmatprep.subr.mxu0 0.0
        %463 = vmatpush1.msra.mxu0 0.0
        %464 = vmatprep.subr.mxu0 0.0
        %465 = vmatpush1.msra.mxu0 0.0
        %466 = vmatprep.subr.mxu0 0.0
        %467 = vmatpush1.msra.mxu0 0.0
        %468 = vmatprep.subr.mxu0 0.0
        %469 = vmatpush1.msra.mxu0 0.0
        %470 = vmatprep.subr.mxu0 0.0
        %471 = vmatpush1.msra.mxu0 0.0
        %472 = vmatprep.subr.mxu0 0.0
        %473 = vmatpush1.msra.mxu0 0.0
        %474 = vmatprep.subr.mxu0 0.0
        %475 = vmatpush1.msra.mxu0 0.0
        %476 = vmatprep.subr.mxu0 0.0
        %477 = vmatpush1.msra.mxu0 0.0
        %478 = vmatprep.subr.mxu0 0.0
        %479 = vmatpush1.msra.mxu0 0.0
        %480 = vmatprep.subr.mxu0 0.0
        %481 = vmatpush1.msra.mxu0 0.0
        %482 = vmatprep.subr.mxu0 0.0
        %483 = vmatpush1.msra.mxu0 0.0
        %484 = vmatprep.subr.mxu0 0.0
        %485 = vmatpush1.msra.mxu0 0.0
        %486 = vmatprep.subr.mxu0 0.0
        %487 = vmatpush1.msra.mxu0 0.0
        %488 = vmatprep.subr.mxu0 0.0
        %489 = vmatpush1.msra.mxu0 0.0
        %490 = vmatprep.subr.mxu0 0.0
        %491 = vmatpush1.msra.mxu0 0.0
        %492 = vmatprep.mubr.f32.mxu0 0.0
        %493 = vmatmul.mubr.f32.gmra.mrb[0].mxu0 %v426
        %v494 = vpop.f32.mrb[0].mxu0
        %v495 = vadd.f32 %v423, %v494
        %v496 = vpop.f32.mrb[0].mxu0
        %v497 = vadd.f32 %v423, %v496
        %498 = vdwg.mxu0
        %499 = vst [vmem:[%s217] sm:$0xff] %v495
        %500 = vst [vmem:[%s217 + $0x8] sm:$0xff] %v497
        %s501 = sand.u32 %s137, 1
        %s502 = scalar_lea.sflag [#allocation4], %s501
        %s503 = sand.u32 %s137, 1
        %s504 = smul.addr %s503, 16
        %s505 = scalar_lea.vmem [#allocation3], %s504
        // Predicated region
        $region41: #{tpu_custom_call.1} parent=39 // pred_check
          %p506 = pneg %p147
        $region42: #{tpu_custom_call.1} parent=39 // pred_check_branch
          %508 = sbr.rel (%p506) target = $region44
        $region43: #{tpu_custom_call.1} parent=39 // pred_region
          %s510 = ssub.s32 256, 256
          %511 = vsyncadd %s502, %s510
          %s512 = smul.addr %s19, 2
          %s513 = smul.addr %s512, 128
          %s514 = scalar_lea.hbm %s5, %s513
          %s516 = sshll.u32 %s505, 4
          %s517 = int_to_ptr.vmem [resolvable:$true] %s516
          %519 = dma.vmem_to_hbm [thread:$0]  %s517, 256, %s514, %s502
        $region44: #{tpu_custom_call.1} parent=39 // pred_fallthru
          _
      $region40: #{tpu_custom_call.1} parent=5 // pred_fallthru
        _
      %p520 = scmp.le.s32.totalorder 2, %s14
      // Predicated region
      $region45: #{tpu_custom_call.1} parent=5 // pred_check
        %p521 = pneg %p520
      $region46: #{tpu_custom_call.1} parent=5 // pred_check_branch
        %523 = sbr.rel (%p521) target = $region48
      $region47: #{tpu_custom_call.1} parent=5 // pred_region
        %s524 = ssub.s32 %s14, 2
        // Predicated region
        $region49: #{tpu_custom_call.1} parent=47 // pred_check
          %p525 = pneg %p153
        $region50: #{tpu_custom_call.1} parent=47 // pred_check_branch
          %527 = sbr.rel (%p525) target = $region52
        $region51: #{tpu_custom_call.1} parent=47 // pred_region
          %s528 = sand.u32 %s138, 1
          %s529 = scalar_lea.sflag [#allocation4], %s528
          %s530 = sand.u32 %s138, 1
          %s531 = smul.addr %s530, 16
          %s532 = scalar_lea.vmem [#allocation3], %s531
          %533 = dma.done %s529, 256
        $region52: #{tpu_custom_call.1} parent=47 // pred_fallthru
          _
      $region48: #{tpu_custom_call.1} parent=5 // pred_fallthru
        _
    $region6: #{tpu_custom_call.1} parent=1 // loop_footer
      %s18 = sadd.s32 1, %s14
    $region7: #{tpu_custom_call.1} parent=1 // loop_footer_branch
      %13 = sbr.rel target = $region3
    $region8: #{tpu_custom_call.1} parent=1 // loop_exit
      _
    %534 = vsyncpa [#allocation4], 1
    %s535 = scalar_lea.sflag [#allocation4], 1
    %536 = vsyncpa %s535, 1

</llo_original>
